<compile_context>
chip_gen: v7x
topology: tpu7x:2x2x1
jax: 0.10.0
libtpu: 0.0.40
codegen_flags: <defaults>
</compile_context>

<pallas_src>
import jax
import jax.numpy as jnp
import numpy as np
from jax.experimental import pallas as pl
from jax.experimental.pallas import tpu as pltpu

C_IN, C_OUT = 18, 256
KH, KW = 3, 3
H, W = 9, 7
K = C_IN * KH * KW          # 162
BN_EPS = 1e-5
TM_MAX = 1024               # M-tile rows (multiple of 16, fits VMEM on v5e/v6e/v7x)


def conv_stats_kernel(patches_ref, w_ref, y_ref, stats_ref):
    """Pass 1: conv-as-matmul (bf16 in, fp32 accum on MXU) + partial BN stats."""
    y = jnp.dot(patches_ref[...], w_ref[...],
                preferred_element_type=jnp.float32)        # (tm, Cout) fp32
    y_ref[...] = y
    s = jnp.sum(y, axis=0, keepdims=True)                  # (1, Cout)
    ss = jnp.sum(y * y, axis=0, keepdims=True)             # (1, Cout)
    stats_ref[...] = jnp.concatenate([s, ss], axis=0)[None, :, :]   # (1, 2, Cout)


def bn_relu_kernel(y_ref, scale_ref, shift_ref, o_ref):
    """Pass 2: folded BN affine + ReLU in one elementwise pass."""
    o_ref[...] = jnp.maximum(y_ref[...] * scale_ref[...] + shift_ref[...], 0.0)


def im2col_bf16(x):
    """x: (N, Cin, H, W) fp32 -> (N*H*W, Cin*KH*KW) bf16 patches, padding=1."""
    N = x.shape[0]
    xb = x.astype(jnp.bfloat16)
    xp = jnp.pad(xb, ((0, 0), (0, 0), (1, 1), (1, 1)))
    cols = []
    for i in range(KH):
        for j in range(KW):
            cols.append(xp[:, :, i:i + H, j:j + W])         # (N, Cin, H, W)
    p = jnp.stack(cols, axis=2)                             # (N, Cin, KH*KW, H, W)
    p = p.transpose(0, 3, 4, 1, 2)                          # (N, H, W, Cin, KH*KW)
    return p.reshape(N * H * W, K)


def conv_block_forward(x, conv_w, conv_b, bn_gamma, bn_beta):
    """x: (..., 18, 9, 7) fp32 -> (N, 256, 9, 7) fp32."""
    del conv_b  # cancels exactly under training-mode BatchNorm (y - mu unchanged)
    x = x.reshape(-1, C_IN, H, W)
    N = x.shape[0]
    M = N * H * W

    # M tiling: small M -> one sublane-aligned block; large M -> 1024-row tiles.
    M16 = ((M + 15) // 16) * 16
    if M16 <= TM_MAX:
        tm = M16
        m_pad = M16
    else:
        tm = TM_MAX
        m_pad = pl.cdiv(M, TM_MAX) * TM_MAX
    num_tiles = m_pad // tm

    # TODO(synk): at production batch sizes, fuse patch construction into the
    # kernel (DMA the NHWC slab + halo, build the 9 taps in VMEM) to avoid the
    # 9x im2col expansion in HBM.
    patches = im2col_bf16(x)                                       # (M, K) bf16
    if m_pad != M:
        patches = jnp.pad(patches, ((0, m_pad - M), (0, 0)))       # zero rows -> y = 0

    # torch conv weight (Cout, Cin, KH, KW) -> (K, Cout), bf16 (fp32 MXU accum)
    w_mat = conv_w.reshape(C_OUT, K).T.astype(jnp.bfloat16)

    cparams = pltpu.CompilerParams(
        dimension_semantics=("parallel",),        # row tiles independent (2 TCs on v7x)
        vmem_limit_bytes=32 * 1024 * 1024,        # explicit; ~4 MB actually used per step
    )

    # Pass 1: tiled matmul -> y (fp32) + per-tile partial sum / sum-of-squares.
    y_flat, stats = pl.pallas_call(
        conv_stats_kernel,
        out_shape=(
            jax.ShapeDtypeStruct((m_pad, C_OUT), jnp.float32),
            jax.ShapeDtypeStruct((num_tiles, 2, C_OUT), jnp.float32),
        ),
        grid=(num_tiles,),
        in_specs=[
            pl.BlockSpec((tm, K), lambda i: (i, 0)),
            pl.BlockSpec((K, C_OUT), lambda i: (0, 0)),
        ],
        out_specs=(
            pl.BlockSpec((tm, C_OUT), lambda i: (i, 0)),
            pl.BlockSpec((1, 2, C_OUT), lambda i: (i, 0, 0)),
        ),
        compiler_params=cparams,
    )(patches, w_mat)

    # Global BN statistics over the true M rows (padded rows contribute exact
    # zeros to both partial sums since there is no conv bias).
    sum_c = jnp.sum(stats[:, 0, :], axis=0)                         # (Cout,)
    sumsq_c = jnp.sum(stats[:, 1, :], axis=0)                       # (Cout,)
    mu = sum_c / M
    var = jnp.maximum(sumsq_c / M - mu * mu, 0.0)                   # biased variance
    scale = (bn_gamma.astype(jnp.float32) * jax.lax.rsqrt(var + BN_EPS))
    shift = bn_beta.astype(jnp.float32) - mu * scale
    scale = scale.reshape(1, C_OUT)
    shift = shift.reshape(1, C_OUT)

    # Pass 2: tiled fused scale/shift + ReLU (lane-dense 256-wide output).
    out_flat = pl.pallas_call(
        bn_relu_kernel,
        out_shape=jax.ShapeDtypeStruct((m_pad, C_OUT), jnp.float32),
        grid=(num_tiles,),
        in_specs=[
            pl.BlockSpec((tm, C_OUT), lambda i: (i, 0)),
            pl.BlockSpec((1, C_OUT), lambda i: (0, 0)),
            pl.BlockSpec((1, C_OUT), lambda i: (0, 0)),
        ],
        out_specs=pl.BlockSpec((tm, C_OUT), lambda i: (i, 0)),
        compiler_params=cparams,
    )(y_flat, scale, shift)

    # (M, Cout) NHWC-flat -> NCHW (N, Cout, H, W)
    out_flat = out_flat[:M]
    return out_flat.reshape(N, H, W, C_OUT).transpose(0, 3, 1, 2)


def reference_forward(x, conv_w, conv_b, bn_gamma, bn_beta):
    """Pure-JAX reference matching the PyTorch module (training-mode BN).
    Conv inputs cast to bf16 (fp32 accumulation) to match the kernel's MXU precision;
    the conv bias is kept here to verify it cancels under BN."""
    x = x.reshape(-1, C_IN, H, W)
    y = jax.lax.conv_general_dilated(
        x.astype(jnp.bfloat16), conv_w.astype(jnp.bfloat16),
        window_strides=(1, 1), padding=((1, 1), (1, 1)),
        dimension_numbers=("NCHW", "OIHW", "NCHW"),
        preferred_element_type=jnp.float32)
    y = y + conv_b.reshape(1, C_OUT, 1, 1).astype(jnp.float32)
    mu = jnp.mean(y, axis=(0, 2, 3), keepdims=True)
    var = jnp.mean((y - mu) ** 2, axis=(0, 2, 3), keepdims=True)
    y = (y - mu) * jax.lax.rsqrt(var + BN_EPS)
    y = y * bn_gamma.reshape(1, C_OUT, 1, 1) + bn_beta.reshape(1, C_OUT, 1, 1)
    return jnp.maximum(y, 0.0)


if __name__ == "__main__":
    key = jax.random.PRNGKey(0)
    k_x, k_w, k_b, k_g, k_beta = jax.random.split(key, 5)

    N = 2
    x = jax.random.normal(k_x, (N, C_IN, H, W), dtype=jnp.float32)

    # Deterministic synthetic parameters (shapes from nn.Conv2d / nn.BatchNorm2d)
    fan_in = C_IN * KH * KW
    conv_w = jax.random.normal(k_w, (C_OUT, C_IN, KH, KW), dtype=jnp.float32) / np.sqrt(fan_in)
    conv_b = jax.random.normal(k_b, (C_OUT,), dtype=jnp.float32) * 0.1
    bn_gamma = 1.0 + 0.1 * jax.random.normal(k_g, (C_OUT,), dtype=jnp.float32)
    bn_beta = 0.1 * jax.random.normal(k_beta, (C_OUT,), dtype=jnp.float32)

    out = jax.block_until_ready(conv_block_forward(x, conv_w, conv_b, bn_gamma, bn_beta))
    ref = jax.block_until_ready(reference_forward(x, conv_w, conv_b, bn_gamma, bn_beta))

    assert out.shape == (N, C_OUT, H, W), out.shape
    np.testing.assert_allclose(np.asarray(out), np.asarray(ref), rtol=1e-3, atol=1e-3)
    print("KERNEL_OK")
</pallas_src>

<mosaic_0001>
module attributes {stable_mosaic.version = 11 : i64} {
  func.func @conv_stats_kernel(%arg0: i32, %arg1: memref<128x162xbf16, #tpu.memory_space<vmem>>, %arg2: memref<162x256xbf16, #tpu.memory_space<vmem>>, %arg3: memref<128x256xf32, #tpu.memory_space<vmem>>, %arg4: memref<1x2x256xf32, #tpu.memory_space<vmem>>) attributes {dimension_semantics = [#tpu.dimension_semantics<parallel>], iteration_bounds = array<i64: 1>, scalar_prefetch = 0 : i64, scratch_operands = 0 : i64, tpu.core_type = #tpu.core_type<tc>, window_params = [{transform_indices = @transform_0, window_bounds = array<i64: 128, 162>}, {pipeline_mode = #tpu.pipeline_mode<synchronous>, transform_indices = @transform_1, window_bounds = array<i64: 162, 256>}, {transform_indices = @transform_2, window_bounds = array<i64: 128, 256>}, {transform_indices = @transform_3, window_bounds = array<i64: 1, 2, 256>}]} {
    %c0 = arith.constant 0 : index
    %c0_0 = arith.constant 0 : index
    %0 = vector.load %arg1[%c0, %c0_0] : memref<128x162xbf16, #tpu.memory_space<vmem>>, vector<128x162xbf16>
    %c0_1 = arith.constant 0 : index
    %c0_2 = arith.constant 0 : index
    %1 = vector.load %arg2[%c0_1, %c0_2] : memref<162x256xbf16, #tpu.memory_space<vmem>>, vector<162x256xbf16>
    %cst = arith.constant dense<0.000000e+00> : vector<128x256xf32>
    %2 = tpu.matmul %0, %1, %cst {dimension_numbers = #tpu.dot_dimension_numbers<[1], [0], [0], [1], [0, 0, 1, 1], [], []>} : vector<128x162xbf16>, vector<162x256xbf16>, vector<128x256xf32> -> vector<128x256xf32>
    %c0_3 = arith.constant 0 : index
    %c0_4 = arith.constant 0 : index
    %3 = vector.load %arg3[%c0_3, %c0_4] : memref<128x256xf32, #tpu.memory_space<vmem>>, vector<128x256xf32>
    tpu.vector_store %arg3[%c0_3, %c0_4], %2 {strides = array<i32>} : memref<128x256xf32, #tpu.memory_space<vmem>>, vector<128x256xf32>,
    %cst_5 = arith.constant dense<0.000000e+00> : vector<256xf32>
    %4 = vector.multi_reduction <add>, %2, %cst_5 [0] : vector<128x256xf32> to vector<256xf32>
    %5 = vector.shape_cast %4 : vector<256xf32> to vector<1x256xf32>
    %6 = arith.mulf %2, %2 : vector<128x256xf32>
    %cst_6 = arith.constant dense<0.000000e+00> : vector<256xf32>
    %7 = vector.multi_reduction <add>, %6, %cst_6 [0] : vector<128x256xf32> to vector<256xf32>
    %8 = vector.shape_cast %7 : vector<256xf32> to vector<1x256xf32>
    %9 = tpu.concatenate %5, %8 in 0 : vector<1x256xf32>, vector<1x256xf32> -> vector<2x256xf32>
    %10 = vector.shape_cast %9 : vector<2x256xf32> to vector<1x2x256xf32>
    %c0_7 = arith.constant 0 : index
    %c0_8 = arith.constant 0 : index
    %c0_9 = arith.constant 0 : index
    %11 = vector.load %arg4[%c0_7, %c0_8, %c0_9] : memref<1x2x256xf32, #tpu.memory_space<vmem>>, vector<1x2x256xf32>
    tpu.vector_store %arg4[%c0_7, %c0_8, %c0_9], %10 {strides = array<i32>} : memref<1x2x256xf32, #tpu.memory_space<vmem>>, vector<1x2x256xf32>,
    return
  }
  func.func @transform_0(%arg0: i32) -> (i32, i32) {
    %c0_i32 = arith.constant 0 : i32
    %c0_i32_0 = arith.constant 0 : i32
    return %arg0, %c0_i32 : i32, i32
  }
  func.func @transform_1(%arg0: i32) -> (i32, i32) {
    %c0_i32 = arith.constant 0 : i32
    %c0_i32_0 = arith.constant 0 : i32
    %c0_i32_1 = arith.constant 0 : i32
    return %c0_i32, %c0_i32_0 : i32, i32
  }
  func.func @transform_2(%arg0: i32) -> (i32, i32) {
    %c0_i32 = arith.constant 0 : i32
    %c0_i32_0 = arith.constant 0 : i32
    return %arg0, %c0_i32 : i32, i32
  }
  func.func @transform_3(%arg0: i32) -> (i32, i32, i32) {
    %c0_i32 = arith.constant 0 : i32
    %c0_i32_0 = arith.constant 0 : i32
    %c0_i32_1 = arith.constant 0 : i32
    return %arg0, %c0_i32, %c0_i32_0 : i32, i32, i32
  }
}

</mosaic_0001>

<llo_original>
// kernel: tpu_custom_call.1
$region0: #{tpu_custom_call.1}
  #allocation0 [shape = 'u32[]', space=smem, size = 0x4, offset = 0x4, fixed_abs, tag = 'smem constant byte address 0x4 - core index']
  #allocation1 [shape = 'u32[144,128]{1,0:T(1,128)}', space=vmem, size = 0x12000, scoped, tag = 'internal scratch']
  %s0 = inlined_call_operand.vmem [shape: bf16[128,162], index: 0, kind: input, shape index: {}]
  %s1 = inlined_call_operand.vmem [shape: bf16[162,256], index: 1, kind: input, shape index: {}]
  %s2 = inlined_call_operand.hbm [shape: f32[128,256], index: 2, kind: output, shape index: {0}]
  %s3 = inlined_call_operand.hbm [shape: f32[1,2,256], index: 3, kind: output, shape index: {1}]
  %4 = xla_tuple %s2, %s3
  %s5 = sld [smem:[#allocation0]]
  $region26: #{tpu_custom_call.1} parent=0
    _
  %s7 = ssub.s32 1, %s5
  %s8 = scalar_select 0, %s7, %s5
  $region1: #{tpu_custom_call.1} parent=0
    #allocation2 [shape = 'u8[131072]{0}', space=vmem, size = 0x20000, scoped, tag = 'output window, operand 0, single buffered']
    #allocation3 [shape = 's32[1]{0}', space=sflag, size = 0x4, scoped, tag = 'scoped memory for tpu_custom_call.1']
    #allocation4 [shape = 'u8[2048]{0}', space=vmem, size = 0x800, scoped, tag = 'output window, operand 1, single buffered']
    #allocation5 [shape = 's32[1]{0}', space=sflag, size = 0x4, scoped, tag = 'scoped memory for tpu_custom_call.1']
    %9 = vsyncpa [#allocation3], 0
    %10 = vsyncpa [#allocation5], 0
    // Predicated region
    $region2: #{tpu_custom_call.1} parent=1 // pred_check
      _
    $region3: #{tpu_custom_call.1} parent=1 // pred_check_branch
      %12 = sbr.rel (0) target = $region5
    $region4: #{tpu_custom_call.1} parent=1 // pred_region
      _
    $region5: #{tpu_custom_call.1} parent=1 // pred_fallthru
      _
    // Predicated region
    $region6: #{tpu_custom_call.1} parent=1 // pred_check
      _
    $region7: #{tpu_custom_call.1} parent=1 // pred_check_branch
      %14 = sbr.rel (0) target = $region9
    $region8: #{tpu_custom_call.1} parent=1 // pred_region
      _
    $region9: #{tpu_custom_call.1} parent=1 // pred_fallthru
      _
    %v16 = vld [vmem:[%s0] sm:$0xff]
    %v17 = vld [vmem:[%s0 + $0x8] sm:$0xff]
    %v18 = vld [vmem:[%s0 + $0x10] sm:$0xff]
    %v19 = vld [vmem:[%s0 + $0x18] sm:$0xff]
    %v20 = vld [vmem:[%s0 + $0x20] sm:$0xff]
    %v21 = vld [vmem:[%s0 + $0x28] sm:$0xff]
    %v22 = vld [vmem:[%s0 + $0x30] sm:$0xff]
    %v23 = vld [vmem:[%s0 + $0x38] sm:$0xff]
    %v24 = vld [vmem:[%s0 + $0x40] sm:$0xff]
    %v25 = vld [vmem:[%s0 + $0x48] sm:$0xff]
    %v26 = vld [vmem:[%s0 + $0x50] sm:$0xff]
    %v27 = vld [vmem:[%s0 + $0x58] sm:$0xff]
    %v28 = vld [vmem:[%s0 + $0x60] sm:$0xff]
    %v29 = vld [vmem:[%s0 + $0x68] sm:$0xff]
    %v30 = vld [vmem:[%s0 + $0x70] sm:$0xff]
    %v31 = vld [vmem:[%s0 + $0x78] sm:$0xff]
    %v32 = vld [vmem:[%s1] sm:$0xff]
    %v33 = vld [vmem:[%s1 + $0x8] sm:$0xff]
    %v34 = vld [vmem:[%s1 + $0x10] sm:$0xff]
    %v35 = vld [vmem:[%s1 + $0x18] sm:$0xff]
    %v36 = vld [vmem:[%s1 + $0x20] sm:$0xff]
    %v37 = vld [vmem:[%s1 + $0x28] sm:$0xff]
    %v38 = vld [vmem:[%s1 + $0x30] sm:$0xff]
    %v39 = vld [vmem:[%s1 + $0x38] sm:$0xff]
    %v40 = vld [vmem:[%s1 + $0x40] sm:$0xff]
    %v41 = vld [vmem:[%s1 + $0x48] sm:$0xff]
    %v42 = vld [vmem:[%s1 + $0x50] sm:$0xff]
    %v43 = vld [vmem:[%s1 + $0x58] sm:$0xff]
    %v44 = vld [vmem:[%s1 + $0x60] sm:$0xff]
    %v45 = vld [vmem:[%s1 + $0x68] sm:$0xff]
    %v46 = vld [vmem:[%s1 + $0x70] sm:$0xff]
    %v47 = vld [vmem:[%s1 + $0x78] sm:$0xff]
    %v48 = vld [vmem:[%s1 + $0x80] sm:$0xff]
    %v49 = vld [vmem:[%s1 + $0x88] sm:$0xff]
    %v50 = vld [vmem:[%s1 + $0x90] sm:$0xff]
    %v51 = vld [vmem:[%s1 + $0x98] sm:$0xff]
    %v52 = vld [vmem:[%s1 + $0xa0] sm:$0x11]
    %v69 = vunpack.c.l.b16 %v16
    %v70 = vunpack.c.h.b16 %v16
    %v71 = vunpack.c.l.b16 %v17
    %v72 = vunpack.c.h.b16 %v17
    %v73 = vunpack.c.l.b16 %v18
    %v74 = vunpack.c.h.b16 %v18
    %v75 = vunpack.c.l.b16 %v19
    %v76 = vunpack.c.h.b16 %v19
    %v77 = vunpack.c.l.b16 %v20
    %v78 = vunpack.c.h.b16 %v20
    %v79 = vunpack.c.l.b16 %v21
    %v80 = vunpack.c.h.b16 %v21
    %v81 = vunpack.c.l.b16 %v22
    %v82 = vunpack.c.h.b16 %v22
    %v83 = vunpack.c.l.b16 %v23
    %v84 = vunpack.c.h.b16 %v23
    %v85 = vunpack.c.l.b16 %v24
    %v86 = vunpack.c.h.b16 %v24
    %v87 = vunpack.c.l.b16 %v25
    %v88 = vunpack.c.h.b16 %v25
    %v89 = vunpack.c.l.b16 %v26
    %v90 = vunpack.c.h.b16 %v26
    %v91 = vunpack.c.l.b16 %v27
    %v92 = vunpack.c.h.b16 %v27
    %v93 = vunpack.c.l.b16 %v28
    %v94 = vunpack.c.h.b16 %v28
    %v95 = vunpack.c.l.b16 %v29
    %v96 = vunpack.c.h.b16 %v29
    %v97 = vunpack.c.l.b16 %v30
    %v98 = vunpack.c.h.b16 %v30
    %v99 = vunpack.c.l.b16 %v31
    %v100 = vunpack.c.h.b16 %v31
    %v101 = vpack.c.b16 %v71, %v69
    %v102 = vpack.c.b16 %v72, %v70
    %v103 = vpack.c.b16 %v75, %v73
    %v104 = vpack.c.b16 %v76, %v74
    %v105 = vpack.c.b16 %v79, %v77
    %v106 = vpack.c.b16 %v80, %v78
    %v107 = vpack.c.b16 %v83, %v81
    %v108 = vpack.c.b16 %v84, %v82
    %v109 = vpack.c.b16 %v87, %v85
    %v110 = vpack.c.b16 %v88, %v86
    %v111 = vpack.c.b16 %v91, %v89
    %v112 = vpack.c.b16 %v92, %v90
    %v113 = vpack.c.b16 %v95, %v93
    %v114 = vpack.c.b16 %v96, %v94
    %v115 = vpack.c.b16 %v99, %v97
    %v116 = vpack.c.b16 %v100, %v98
    %v146 = vunpack.c.l.b16 %v32
    %v147 = vunpack.c.h.b16 %v32
    %v148 = vunpack.c.l.b16 %v33
    %v149 = vunpack.c.h.b16 %v33
    %v150 = vunpack.c.l.b16 %v34
    %v151 = vunpack.c.h.b16 %v34
    %v152 = vunpack.c.l.b16 %v35
    %v153 = vunpack.c.h.b16 %v35
    %v154 = vunpack.c.l.b16 %v36
    %v155 = vunpack.c.h.b16 %v36
    %v156 = vunpack.c.l.b16 %v37
    %v157 = vunpack.c.h.b16 %v37
    %v158 = vunpack.c.l.b16 %v38
    %v159 = vunpack.c.h.b16 %v38
    %v160 = vunpack.c.l.b16 %v39
    %v161 = vunpack.c.h.b16 %v39
    %v162 = vunpack.c.l.b16 %v40
    %v163 = vunpack.c.h.b16 %v40
    %v164 = vunpack.c.l.b16 %v41
    %v165 = vunpack.c.h.b16 %v41
    %v166 = vunpack.c.l.b16 %v42
    %v167 = vunpack.c.h.b16 %v42
    %v168 = vunpack.c.l.b16 %v43
    %v169 = vunpack.c.h.b16 %v43
    %v170 = vunpack.c.l.b16 %v44
    %v171 = vunpack.c.h.b16 %v44
    %v172 = vunpack.c.l.b16 %v45
    %v173 = vunpack.c.h.b16 %v45
    %v174 = vunpack.c.l.b16 %v46
    %v175 = vunpack.c.h.b16 %v46
    %v176 = vunpack.c.l.b16 %v47
    %v177 = vunpack.c.h.b16 %v47
    %v178 = vunpack.c.l.b16 %v48
    %v179 = vunpack.c.h.b16 %v48
    %v180 = vunpack.c.l.b16 %v49
    %v181 = vunpack.c.h.b16 %v49
    %v182 = vunpack.c.l.b16 %v50
    %v183 = vunpack.c.h.b16 %v50
    %v184 = vunpack.c.l.b16 %v51
    %v185 = vunpack.c.h.b16 %v51
    %v186 = vunpack.c.l.b16 %v52
    %v187 = vunpack.c.h.b16 %v52
    %v188 = vpack.c.b16 %v148, %v146
    %v189 = vpack.c.b16 %v149, %v147
    %v190 = vpack.c.b16 %v152, %v150
    %v191 = vpack.c.b16 %v153, %v151
    %v192 = vpack.c.b16 %v156, %v154
    %v193 = vpack.c.b16 %v157, %v155
    %v194 = vpack.c.b16 %v160, %v158
    %v195 = vpack.c.b16 %v161, %v159
    %v196 = vpack.c.b16 %v164, %v162
    %v197 = vpack.c.b16 %v165, %v163
    %v198 = vpack.c.b16 %v168, %v166
    %v199 = vpack.c.b16 %v169, %v167
    %v200 = vpack.c.b16 %v172, %v170
    %v201 = vpack.c.b16 %v173, %v171
    %v202 = vpack.c.b16 %v176, %v174
    %v203 = vpack.c.b16 %v177, %v175
    %v204 = vpack.c.b16 %v180, %v178
    %v205 = vpack.c.b16 %v181, %v179
    %v206 = vpack.c.b16 %v184, %v182
    %v207 = vpack.c.b16 %v185, %v183
    %v208 = vpack.c.b16 %v186, %v186
    %v209 = vpack.c.b16 %v187, %v187
    %vm230 = vcmask 277504
    %v232 = vsel %vm230, %v102, 0
    %v235 = vsel %vm230, %v104, 0
    %v238 = vsel %vm230, %v106, 0
    %v241 = vsel %vm230, %v108, 0
    %v244 = vsel %vm230, %v110, 0
    %v247 = vsel %vm230, %v112, 0
    %v250 = vsel %vm230, %v114, 0
    %v253 = vsel %vm230, %v116, 0
    %vm255 = vcmask 1040384
    %v257 = vsel %vm255, %v208, 0
    %v260 = vsel %vm255, %v209, 0
    %262 = vmatprep.subr.bf16.mxu0 %v189
    %263 = vmatpush1.bf16.msra.mxu0 %v188
    %264 = vmatprep.subr.bf16.mxu0 %v191
    %265 = vmatpush1.bf16.msra.mxu0 %v190
    %266 = vmatprep.subr.bf16.mxu0 %v193
    %267 = vmatpush1.bf16.msra.mxu0 %v192
    %268 = vmatprep.subr.bf16.mxu0 %v195
    %269 = vmatpush1.bf16.msra.mxu0 %v194
    %270 = vmatprep.subr.bf16.mxu0 %v197
    %271 = vmatpush1.bf16.msra.mxu0 %v196
    %272 = vmatprep.subr.bf16.mxu0 %v199
    %273 = vmatpush1.bf16.msra.mxu0 %v198
    %274 = vmatprep.subr.bf16.mxu0 %v201
    %275 = vmatpush1.bf16.msra.mxu0 %v200
    %276 = vmatprep.subr.bf16.mxu0 %v203
    %277 = vmatpush1.bf16.msra.mxu0 %v202
    %278 = vmatprep.subr.bf16.mxu0 %v205
    %279 = vmatpush1.bf16.msra.mxu0 %v204
    %280 = vmatprep.subr.bf16.mxu0 %v207
    %281 = vmatpush1.bf16.msra.mxu0 %v206
    %282 = vmatprep.subr.bf16.mxu0 %v260
    %283 = vmatpush1.bf16.msra.mxu0 %v257
    %284 = vmatprep.subr.bf16.mxu0 0
    %285 = vmatpush1.bf16.msra.mxu0 0
    %286 = vmatprep.subr.bf16.mxu0 0
    %287 = vmatpush1.bf16.msra.mxu0 0
    %288 = vmatprep.subr.bf16.mxu0 0
    %289 = vmatpush1.bf16.msra.mxu0 0
    %290 = vmatprep.subr.bf16.mxu0 0
    %291 = vmatpush1.bf16.msra.mxu0 0
    %292 = vmatprep.subr.bf16.mxu0 0
    %293 = vmatpush1.bf16.msra.mxu0 0
    %294 = vmatprep.mubr.bf16.mxu0 %v232
    %295 = vmatmul.mubr.bf16.gmra.mrb[0].mxu0 %v101
    %v296 = vpop.f32.mrb[0].mxu0
    %v297 = vadd.f32 0.0, %v296
    %v298 = vpop.f32.mrb[0].mxu0
    %v299 = vadd.f32 0.0, %v298
    %v300 = vpop.f32.mrb[0].mxu0
    %v301 = vadd.f32 0.0, %v300
    %v302 = vpop.f32.mrb[0].mxu0
    %v303 = vadd.f32 0.0, %v302
    %304 = vmatprep.mubr.bf16.mxu0 %v235
    %305 = vmatmul.mubr.bf16.gmra.mrb[0].mxu0 %v103
    %v306 = vpop.f32.mrb[0].mxu0
    %v307 = vadd.f32 0.0, %v306
    %v308 = vpop.f32.mrb[0].mxu0
    %v309 = vadd.f32 0.0, %v308
    %v310 = vpop.f32.mrb[0].mxu0
    %v311 = vadd.f32 0.0, %v310
    %v312 = vpop.f32.mrb[0].mxu0
    %v313 = vadd.f32 0.0, %v312
    %314 = vmatprep.mubr.bf16.mxu0 %v238
    %315 = vmatmul.mubr.bf16.gmra.mrb[0].mxu0 %v105
    %v316 = vpop.f32.mrb[0].mxu0
    %v317 = vadd.f32 0.0, %v316
    %v318 = vpop.f32.mrb[0].mxu0
    %v319 = vadd.f32 0.0, %v318
    %v320 = vpop.f32.mrb[0].mxu0
    %v321 = vadd.f32 0.0, %v320
    %v322 = vpop.f32.mrb[0].mxu0
    %v323 = vadd.f32 0.0, %v322
    %324 = vmatprep.mubr.bf16.mxu0 %v241
    %325 = vmatmul.mubr.bf16.gmra.mrb[0].mxu0 %v107
    %v326 = vpop.f32.mrb[0].mxu0
    %v327 = vadd.f32 0.0, %v326
    %v328 = vpop.f32.mrb[0].mxu0
    %v329 = vadd.f32 0.0, %v328
    %v330 = vpop.f32.mrb[0].mxu0
    %v331 = vadd.f32 0.0, %v330
    %v332 = vpop.f32.mrb[0].mxu0
    %v333 = vadd.f32 0.0, %v332
    %334 = vmatprep.mubr.bf16.mxu0 %v244
    %335 = vmatmul.mubr.bf16.gmra.mrb[0].mxu0 %v109
    %v336 = vpop.f32.mrb[0].mxu0
    %v337 = vadd.f32 0.0, %v336
    %v338 = vpop.f32.mrb[0].mxu0
    %v339 = vadd.f32 0.0, %v338
    %v340 = vpop.f32.mrb[0].mxu0
    %v341 = vadd.f32 0.0, %v340
    %v342 = vpop.f32.mrb[0].mxu0
    %v343 = vadd.f32 0.0, %v342
    %344 = vmatprep.mubr.bf16.mxu0 %v247
    %345 = vmatmul.mubr.bf16.gmra.mrb[0].mxu0 %v111
    %v346 = vpop.f32.mrb[0].mxu0
    %v347 = vadd.f32 0.0, %v346
    %v348 = vpop.f32.mrb[0].mxu0
    %v349 = vadd.f32 0.0, %v348
    %v350 = vpop.f32.mrb[0].mxu0
    %v351 = vadd.f32 0.0, %v350
    %v352 = vpop.f32.mrb[0].mxu0
    %v353 = vadd.f32 0.0, %v352
    %354 = vmatprep.mubr.bf16.mxu0 %v250
    %355 = vmatmul.mubr.bf16.gmra.mrb[0].mxu0 %v113
    %v356 = vpop.f32.mrb[0].mxu0
    %v357 = vadd.f32 0.0, %v356
    %v358 = vpop.f32.mrb[0].mxu0
    %v359 = vadd.f32 0.0, %v358
    %v360 = vpop.f32.mrb[0].mxu0
    %v361 = vadd.f32 0.0, %v360
    %v362 = vpop.f32.mrb[0].mxu0
    %v363 = vadd.f32 0.0, %v362
    %364 = vmatprep.mubr.bf16.mxu0 %v253
    %365 = vmatmul.mubr.bf16.gmra.mrb[0].mxu0 %v115
    %v366 = vpop.f32.mrb[0].mxu0
    %v367 = vadd.f32 0.0, %v366
    %v368 = vpop.f32.mrb[0].mxu0
    %v369 = vadd.f32 0.0, %v368
    %v370 = vpop.f32.mrb[0].mxu0
    %v371 = vadd.f32 0.0, %v370
    %v372 = vpop.f32.mrb[0].mxu0
    %v373 = vadd.f32 0.0, %v372
    %374 = vdwg.mxu0
    %375 = vst [vmem:[#allocation2] sm:$0xff] %v297
    %376 = vst [vmem:[#allocation2 + $0x8] sm:$0xff] %v299
    %377 = vst [vmem:[#allocation2 + $0x10] sm:$0xff] %v301
    %378 = vst [vmem:[#allocation2 + $0x18] sm:$0xff] %v303
    %379 = vst [vmem:[#allocation2 + $0x20] sm:$0xff] %v307
    %380 = vst [vmem:[#allocation2 + $0x28] sm:$0xff] %v309
    %381 = vst [vmem:[#allocation2 + $0x30] sm:$0xff] %v311
    %382 = vst [vmem:[#allocation2 + $0x38] sm:$0xff] %v313
    %383 = vst [vmem:[#allocation2 + $0x40] sm:$0xff] %v317
    %384 = vst [vmem:[#allocation2 + $0x48] sm:$0xff] %v319
    %385 = vst [vmem:[#allocation2 + $0x50] sm:$0xff] %v321
    %386 = vst [vmem:[#allocation2 + $0x58] sm:$0xff] %v323
    %387 = vst [vmem:[#allocation2 + $0x60] sm:$0xff] %v327
    %388 = vst [vmem:[#allocation2 + $0x68] sm:$0xff] %v329
    %389 = vst [vmem:[#allocation2 + $0x70] sm:$0xff] %v331
    %390 = vst [vmem:[#allocation2 + $0x78] sm:$0xff] %v333
    %391 = vst [vmem:[#allocation2 + $0x80] sm:$0xff] %v337
    %392 = vst [vmem:[#allocation2 + $0x88] sm:$0xff] %v339
    %393 = vst [vmem:[#allocation2 + $0x90] sm:$0xff] %v341
    %394 = vst [vmem:[#allocation2 + $0x98] sm:$0xff] %v343
    %395 = vst [vmem:[#allocation2 + $0xa0] sm:$0xff] %v347
    %396 = vst [vmem:[#allocation2 + $0xa8] sm:$0xff] %v349
    %397 = vst [vmem:[#allocation2 + $0xb0] sm:$0xff] %v351
    %398 = vst [vmem:[#allocation2 + $0xb8] sm:$0xff] %v353
    %399 = vst [vmem:[#allocation2 + $0xc0] sm:$0xff] %v357
    %400 = vst [vmem:[#allocation2 + $0xc8] sm:$0xff] %v359
    %401 = vst [vmem:[#allocation2 + $0xd0] sm:$0xff] %v361
    %402 = vst [vmem:[#allocation2 + $0xd8] sm:$0xff] %v363
    %403 = vst [vmem:[#allocation2 + $0xe0] sm:$0xff] %v367
    %404 = vst [vmem:[#allocation2 + $0xe8] sm:$0xff] %v369
    %405 = vst [vmem:[#allocation2 + $0xf0] sm:$0xff] %v371
    %406 = vst [vmem:[#allocation2 + $0xf8] sm:$0xff] %v373
    %v407 = vadd.f32 %v297, %v301
    %v408 = vadd.f32 %v407, %v307
    %v409 = vadd.f32 %v408, %v311
    %v410 = vadd.f32 %v409, %v317
    %v411 = vadd.f32 %v410, %v321
    %v412 = vadd.f32 %v411, %v327
    %v413 = vadd.f32 %v412, %v331
    %v414 = vadd.f32 %v413, %v337
    %v415 = vadd.f32 %v414, %v341
    %v416 = vadd.f32 %v415, %v347
    %v417 = vadd.f32 %v416, %v351
    %v418 = vadd.f32 %v417, %v357
    %v419 = vadd.f32 %v418, %v361
    %v420 = vadd.f32 %v419, %v367
    %v421 = vadd.f32 %v420, %v371
    %v422 = vrot.slane %v421, 4
    %v423 = vadd.f32 %v421, %v422
    %v424 = vrot.slane %v423, 2
    %v425 = vadd.f32 %v423, %v424
    %v426 = vrot.slane %v425, 1
    %v427 = vadd.f32 %v425, %v426
    %v428 = vadd.f32 %v299, %v303
    %v429 = vadd.f32 %v428, %v309
    %v430 = vadd.f32 %v429, %v313
    %v431 = vadd.f32 %v430, %v319
    %v432 = vadd.f32 %v431, %v323
    %v433 = vadd.f32 %v432, %v329
    %v434 = vadd.f32 %v433, %v333
    %v435 = vadd.f32 %v434, %v339
    %v436 = vadd.f32 %v435, %v343
    %v437 = vadd.f32 %v436, %v349
    %v438 = vadd.f32 %v437, %v353
    %v439 = vadd.f32 %v438, %v359
    %v440 = vadd.f32 %v439, %v363
    %v441 = vadd.f32 %v440, %v369
    %v442 = vadd.f32 %v441, %v373
    %v443 = vrot.slane %v442, 4
    %v444 = vadd.f32 %v442, %v443
    %v445 = vrot.slane %v444, 2
    %v446 = vadd.f32 %v444, %v445
    %v447 = vrot.slane %v446, 1
    %v448 = vadd.f32 %v446, %v447
    %v449 = vmul.f32 %v297, %v297
    %v450 = vmul.f32 %v299, %v299
    %v451 = vmul.f32 %v301, %v301
    %v452 = vmul.f32 %v303, %v303
    %v453 = vmul.f32 %v307, %v307
    %v454 = vmul.f32 %v309, %v309
    %v455 = vmul.f32 %v311, %v311
    %v456 = vmul.f32 %v313, %v313
    %v457 = vmul.f32 %v317, %v317
    %v458 = vmul.f32 %v319, %v319
    %v459 = vmul.f32 %v321, %v321
    %v460 = vmul.f32 %v323, %v323
    %v461 = vmul.f32 %v327, %v327
    %v462 = vmul.f32 %v329, %v329
    %v463 = vmul.f32 %v331, %v331
    %v464 = vmul.f32 %v333, %v333
    %v465 = vmul.f32 %v337, %v337
    %v466 = vmul.f32 %v339, %v339
    %v467 = vmul.f32 %v341, %v341
    %v468 = vmul.f32 %v343, %v343
    %v469 = vmul.f32 %v347, %v347
    %v470 = vmul.f32 %v349, %v349
    %v471 = vmul.f32 %v351, %v351
    %v472 = vmul.f32 %v353, %v353
    %v473 = vmul.f32 %v357, %v357
    %v474 = vmul.f32 %v359, %v359
    %v475 = vmul.f32 %v361, %v361
    %v476 = vmul.f32 %v363, %v363
    %v477 = vmul.f32 %v367, %v367
    %v478 = vmul.f32 %v369, %v369
    %v479 = vmul.f32 %v371, %v371
    %v480 = vmul.f32 %v373, %v373
    %v481 = vadd.f32 %v449, %v451
    %v482 = vadd.f32 %v481, %v453
    %v483 = vadd.f32 %v482, %v455
    %v484 = vadd.f32 %v483, %v457
    %v485 = vadd.f32 %v484, %v459
    %v486 = vadd.f32 %v485, %v461
    %v487 = vadd.f32 %v486, %v463
    %v488 = vadd.f32 %v487, %v465
    %v489 = vadd.f32 %v488, %v467
    %v490 = vadd.f32 %v489, %v469
    %v491 = vadd.f32 %v490, %v471
    %v492 = vadd.f32 %v491, %v473
    %v493 = vadd.f32 %v492, %v475
    %v494 = vadd.f32 %v493, %v477
    %v495 = vadd.f32 %v494, %v479
    %v496 = vrot.slane %v495, 4
    %v497 = vadd.f32 %v495, %v496
    %v498 = vrot.slane %v497, 2
    %v499 = vadd.f32 %v497, %v498
    %v500 = vrot.slane %v499, 1
    %v501 = vadd.f32 %v499, %v500
    %v502 = vadd.f32 %v450, %v452
    %v503 = vadd.f32 %v502, %v454
    %v504 = vadd.f32 %v503, %v456
    %v505 = vadd.f32 %v504, %v458
    %v506 = vadd.f32 %v505, %v460
    %v507 = vadd.f32 %v506, %v462
    %v508 = vadd.f32 %v507, %v464
    %v509 = vadd.f32 %v508, %v466
    %v510 = vadd.f32 %v509, %v468
    %v511 = vadd.f32 %v510, %v470
    %v512 = vadd.f32 %v511, %v472
    %v513 = vadd.f32 %v512, %v474
    %v514 = vadd.f32 %v513, %v476
    %v515 = vadd.f32 %v514, %v478
    %v516 = vadd.f32 %v515, %v480
    %v517 = vrot.slane %v516, 4
    %v518 = vadd.f32 %v516, %v517
    %v519 = vrot.slane %v518, 2
    %v520 = vadd.f32 %v518, %v519
    %v521 = vrot.slane %v520, 1
    %v522 = vadd.f32 %v520, %v521
    %v523 = vsel %vm255, %v427, %v501
    %v524 = vsel %vm255, %v448, %v522
    %v527 = vcombine.low %v523, %v524
    %v529 = vunpack.c.l.s4 1983009808
    %v530 = vunpack.c.0.s8 %v529
    %v531 = vlaneseq
    %v532 = vshrl.u32 %v531, 7
    %v533 = vsub.s32 %v530, %v532
    %v534 = vrot.slane %v527, %v533
    %536 = vst [vmem:[#allocation4] sm:$0xf] %v534
    // Predicated region
    $region10: #{tpu_custom_call.1} parent=1 // pred_check
      _
    $region11: #{tpu_custom_call.1} parent=1 // pred_check_branch
      %538 = sbr.rel (0) target = $region13
    $region12: #{tpu_custom_call.1} parent=1 // pred_region
      %s540 = ssub.s32 4096, 4096
      %541 = vsyncadd [#allocation3], %s540
      %s542 = sshll.u32 [#allocation2], 4
      %s543 = int_to_ptr.vmem [resolvable:$true] %s542
      %548 = dma.vmem_to_hbm [thread:$0]  %s543, 4096, %s2, [#allocation3], 256, 256, 16
    $region13: #{tpu_custom_call.1} parent=1 // pred_fallthru
      _
    // Predicated region
    $region14: #{tpu_custom_call.1} parent=1 // pred_check
      _
    $region15: #{tpu_custom_call.1} parent=1 // pred_check_branch
      %550 = sbr.rel (0) target = $region17
    $region16: #{tpu_custom_call.1} parent=1 // pred_region
      %s552 = ssub.s32 64, 64
      %553 = vsyncadd [#allocation5], %s552
      %s555 = sshll.u32 [#allocation4], 4
      %s556 = int_to_ptr.vmem [resolvable:$true] %s555
      %558 = dma.vmem_to_hbm [thread:$0]  %s556, 64, %s3, [#allocation5]
    $region17: #{tpu_custom_call.1} parent=1 // pred_fallthru
      _
    // Predicated region
    $region18: #{tpu_custom_call.1} parent=1 // pred_check
      _
    $region19: #{tpu_custom_call.1} parent=1 // pred_check_branch
      %560 = sbr.rel (0) target = $region21
    $region20: #{tpu_custom_call.1} parent=1 // pred_region
      %561 = dma.done [#allocation3], 4096
    $region21: #{tpu_custom_call.1} parent=1 // pred_fallthru
      _
    // Predicated region
    $region22: #{tpu_custom_call.1} parent=1 // pred_check
      _
    $region23: #{tpu_custom_call.1} parent=1 // pred_check_branch
      %563 = sbr.rel (0) target = $region25
    $region24: #{tpu_custom_call.1} parent=1 // pred_region
      %564 = dma.done [#allocation5], 64
    $region25: #{tpu_custom_call.1} parent=1 // pred_fallthru
      _
    %565 = vsyncpa [#allocation3], 1
    %566 = vsyncpa [#allocation5], 1

</llo_original>
